<compile_context>
chip_gen: v7x
topology: tpu7x:2x2x1
jax: 0.10.0
libtpu: 0.0.40
codegen_flags: <defaults>
</compile_context>

<pallas_src>
import functools

import jax
import jax.numpy as jnp
from jax.experimental import pallas as pl
from jax.experimental.pallas import tpu as pltpu


# ----------------------------------------------------------------------------
# Kernels
# ----------------------------------------------------------------------------
def _beta_agg_kernel_zero(x_ref, o_ref, *, coeff, threshold):
    """Static beta == 0 specialization: sigmoid term is exactly 0.5, z == x."""
    x = x_ref[...].astype(jnp.float32)
    common = (0.5 * coeff) * x
    sp = jnp.log1p(jnp.exp(jnp.minimum(x, threshold)))      # clamp: no inf
    blend = jnp.where(x <= threshold, sp, x)
    o_ref[...] = (common + (1.0 - coeff) * blend).astype(o_ref.dtype)


def _beta_agg_kernel_const(x_ref, o_ref, *, beta, coeff, threshold):
    """Static (compile-time) beta; constants folded into single multiplies."""
    x = x_ref[...].astype(jnp.float32)
    omb = 1.0 - beta
    inv_omb = 1.0 / omb
    # sigmoid(a) == 0.5 * (1 + tanh(a/2)) -> single EUP tanh, no divide.
    sig = 0.5 * (1.0 + jnp.tanh((0.5 * beta * inv_omb) * x))
    common = coeff * sig * x
    z = x * inv_omb
    sp = jnp.log1p(jnp.exp(jnp.minimum(z, threshold))) * omb  # clamp: no inf
    # x <= threshold*(1-beta)  <=>  z <= threshold   (since 0 <= beta < 1)
    blend = jnp.where(x <= threshold * omb, sp, x)
    o_ref[...] = (common + (1.0 - coeff) * blend).astype(o_ref.dtype)


def _beta_agg_kernel_smem(beta_ref, x_ref, o_ref, *, coeff, threshold):
    """Traced / learned beta passed as an SMEM scalar."""
    x = x_ref[...].astype(jnp.float32)
    beta = beta_ref[0, 0]
    omb = 1.0 - beta
    z = x * (1.0 / omb)
    sig = 0.5 * (1.0 + jnp.tanh((0.5 * beta) * z))
    common = coeff * sig * x
    sp = jnp.log1p(jnp.exp(jnp.minimum(z, threshold))) * omb
    blend = jnp.where(z <= threshold, sp, x)
    o_ref[...] = (common + (1.0 - coeff) * blend).astype(o_ref.dtype)


# ----------------------------------------------------------------------------
# Wrapper
# ----------------------------------------------------------------------------
def _round_up(v, m):
    return (v + m - 1) // m * m


def _tpu_generation():
    """Best-effort TPU generation (5/6/7); 0 if unknown."""
    try:
        kind = jax.devices()[0].device_kind.lower()
    except Exception:
        return 0
    if "v7" in kind or "7x" in kind:
        return 7
    if "v6" in kind:
        return 6
    if "v5" in kind:
        return 5
    if "v4" in kind:
        return 4
    return 0


def beta_agg(x, beta=0.0, coeff=0.5, threshold=20.0, *, target_block_bytes=None):
    """Apply BetaAgg elementwise to an NCHW (or any-shape) float array."""
    orig_shape = x.shape
    orig_dtype = x.dtype
    n = x.size
    itemsize = jnp.dtype(orig_dtype).itemsize

    gen = _tpu_generation()
    if target_block_bytes is None:
        # v6e (128 MiB VMEM): larger tiles.  v5e (16 MiB scoped default) and
        # v7x (64 MiB physical, 2 TCs sharing it): keep ~1 MiB blocks.
        target_block_bytes = (2 << 20) if gen == 6 else (1 << 20)

    xf = x.reshape(-1)

    # Widest lane width (multiple of 128) dividing n -> lane-dense slab, no pad.
    lanes = 0
    for w in (1024, 512, 256, 128):
        if n % w == 0:
            lanes = w
            break
    if lanes:
        rows = n // lanes
        pad = 0
    else:
        # Rare: element count not a multiple of 128 -> minimal pad to 128 lanes.
        lanes = 128
        rows = pl.cdiv(n, lanes)
        pad = rows * lanes - n
        xf = jnp.pad(xf, (0, pad))
    x2d = xf.reshape(rows, lanes)

    # dtype-native sublane multiple: 8 (f32), 16 (bf16/f16), 32 (int8/fp8).
    sub = 8 * max(1, 4 // itemsize)
    max_rows = max(sub, (target_block_bytes // (lanes * itemsize)) // sub * sub)

    # v7x megacore: guarantee several grid steps so "parallel" can shard the
    # stream across both TensorCores (1 TC ~= half the chip's HBM bandwidth).
    total_bytes = n * itemsize
    if gen == 7 and total_bytes > (1 << 20):
        min_steps = 8 if total_bytes > (4 << 20) else 2
    else:
        min_steps = 1

    if rows <= max_rows and min_steps <= 1:
        tile_r = rows                              # single full-extent block
    else:
        tile_r = min(max_rows, _round_up(pl.cdiv(rows, min_steps), sub))
        tile_r = max(sub, min(tile_r, _round_up(rows, sub)))
    num_blocks = pl.cdiv(rows, tile_r)
    # Ragged last block (rows % tile_r != 0) is handled by Pallas: OOB rows are
    # masked on writeback, garbage reads are discarded by the elementwise math.

    x_spec = pl.BlockSpec((tile_r, lanes), lambda i: (i, 0))
    out_spec = pl.BlockSpec((tile_r, lanes), lambda i: (i, 0))

    static_beta = isinstance(beta, (int, float)) and not isinstance(beta, bool)
    if static_beta and float(beta) == 0.0:
        # Default beta == 0: no tanh at all (sigmoid term is the constant 0.5).
        kernel = functools.partial(
            _beta_agg_kernel_zero, coeff=float(coeff), threshold=float(threshold))
        in_specs = [x_spec]
        operands = (x2d,)
    elif static_beta:
        kernel = functools.partial(
            _beta_agg_kernel_const, beta=float(beta),
            coeff=float(coeff), threshold=float(threshold))
        in_specs = [x_spec]
        operands = (x2d,)
    else:
        kernel = functools.partial(
            _beta_agg_kernel_smem, coeff=float(coeff), threshold=float(threshold))
        beta_arr = jnp.asarray(beta, jnp.float32).reshape(1, 1)
        in_specs = [pl.BlockSpec(memory_space=pltpu.SMEM), x_spec]
        operands = (beta_arr, x2d)

    out2d = pl.pallas_call(
        kernel,
        out_shape=jax.ShapeDtypeStruct((rows, lanes), orig_dtype),
        grid=(num_blocks,),
        in_specs=in_specs,
        out_specs=out_spec,
        compiler_params=pltpu.CompilerParams(
            dimension_semantics=("parallel",)),
    )(*operands)

    out_flat = out2d.reshape(-1)
    if pad:
        out_flat = out_flat[:n]
    return out_flat.reshape(orig_shape)


# ----------------------------------------------------------------------------
# Pure-JAX reference (mirrors the PyTorch forward exactly)
# ----------------------------------------------------------------------------
def beta_agg_ref(x, beta=0.0, coeff=0.5, threshold=20.0):
    x = x.astype(jnp.float32)
    omb = 1.0 - beta
    z = x / omb
    sig = jax.nn.sigmoid(beta * z)
    normal = coeff * sig * x + (1.0 - coeff) * jnp.log(1.0 + jnp.exp(z)) * omb
    overflow = coeff * sig * x + (1.0 - coeff) * x
    return jnp.where(z <= threshold, normal, overflow)


if __name__ == "__main__":
    coeff = 0.5
    threshold = 20.0

    key = jax.random.PRNGKey(0)
    k1, k2, k3 = jax.random.split(key, 3)

    # NCHW input, small shape; scaled so some elements cross the threshold.
    x = jax.random.normal(k1, (2, 4, 16, 16), dtype=jnp.float32) * 10.0

    # 1) static nonzero beta -> folded compile-time constant path.
    beta = 0.25
    ref = beta_agg_ref(x, beta=beta, coeff=coeff, threshold=threshold)
    out = jax.block_until_ready(beta_agg(x, beta=beta, coeff=coeff, threshold=threshold))
    assert out.shape == x.shape and out.dtype == x.dtype
    assert jnp.allclose(out, ref, atol=1e-5, rtol=1e-5), "mismatch (static beta)"

    # 2) static beta == 0 (module default) -> specialized no-tanh kernel.
    ref0 = beta_agg_ref(x, beta=0.0, coeff=coeff, threshold=threshold)
    out0 = jax.block_until_ready(beta_agg(x, beta=0.0, coeff=coeff, threshold=threshold))
    assert jnp.allclose(out0, ref0, atol=1e-5, rtol=1e-5), "mismatch (beta==0)"

    # 3) traced / learned beta -> SMEM scalar path.
    out_s = jax.block_until_ready(
        beta_agg(x, beta=jnp.float32(beta), coeff=coeff, threshold=threshold))
    assert jnp.allclose(out_s, ref, atol=1e-5, rtol=1e-5), "mismatch (SMEM beta)"

    # 4) awkward element count + ragged grid (rows % tile_r != 0): exercises
    #    the masked last block path (no wrapper-side row padding / slicing).
    x_odd = jax.random.normal(k2, (3, 5, 16, 16), dtype=jnp.float32) * 10.0
    ref_odd = beta_agg_ref(x_odd, beta=beta, coeff=coeff, threshold=threshold)
    out_odd = jax.block_until_ready(
        beta_agg(x_odd, beta=beta, coeff=coeff, threshold=threshold,
                 target_block_bytes=8 * 256 * 4))
    assert jnp.allclose(out_odd, ref_odd, atol=1e-5, rtol=1e-5), "mismatch (ragged)"

    # 5) bf16 I/O (in-kernel upcast); loose tolerance for the bf16 output cast.
    x_bf = (jax.random.normal(k3, (2, 4, 16, 16), dtype=jnp.float32) * 10.0
            ).astype(jnp.bfloat16)
    ref_bf = beta_agg_ref(x_bf, beta=beta, coeff=coeff, threshold=threshold)
    out_bf = jax.block_until_ready(
        beta_agg(x_bf, beta=beta, coeff=coeff, threshold=threshold))
    assert out_bf.dtype == jnp.bfloat16
    assert jnp.allclose(out_bf.astype(jnp.float32), ref_bf, atol=5e-2, rtol=5e-2), \
        "mismatch (bf16)"

    print("KERNEL_OK")
</pallas_src>

<mosaic_0001>
module attributes {stable_mosaic.version = 11 : i64} {
  func.func @_beta_agg_kernel_const(%arg0: i32, %arg1: memref<2x1024xf32, #tpu.memory_space<vmem>>, %arg2: memref<2x1024xf32, #tpu.memory_space<vmem>>) attributes {dimension_semantics = [#tpu.dimension_semantics<parallel>], iteration_bounds = array<i64: 1>, scalar_prefetch = 0 : i64, scratch_operands = 0 : i64, tpu.core_type = #tpu.core_type<tc>, window_params = [{transform_indices = @transform_0, window_bounds = array<i64: 2, 1024>}, {transform_indices = @transform_1, window_bounds = array<i64: 2, 1024>}]} {
    %c0 = arith.constant 0 : index
    %c0_0 = arith.constant 0 : index
    %0 = vector.load %arg1[%c0, %c0_0] : memref<2x1024xf32, #tpu.memory_space<vmem>>, vector<2x1024xf32>
    %cst = arith.constant 0.166666672 : f32
    %1 = vector.broadcast %cst : f32 to vector<2x1024xf32>
    %2 = arith.mulf %1, %0 : vector<2x1024xf32>
    %3 = math.tanh %2 : vector<2x1024xf32>
    %cst_1 = arith.constant 1.000000e+00 : f32
    %4 = vector.broadcast %cst_1 : f32 to vector<2x1024xf32>
    %5 = arith.addf %4, %3 : vector<2x1024xf32>
    %cst_2 = arith.constant 5.000000e-01 : f32
    %6 = vector.broadcast %cst_2 : f32 to vector<2x1024xf32>
    %7 = arith.mulf %6, %5 : vector<2x1024xf32>
    %cst_3 = arith.constant 5.000000e-01 : f32
    %8 = vector.broadcast %cst_3 : f32 to vector<2x1024xf32>
    %9 = arith.mulf %8, %7 : vector<2x1024xf32>
    %10 = arith.mulf %9, %0 : vector<2x1024xf32>
    %cst_4 = arith.constant 1.33333337 : f32
    %11 = vector.broadcast %cst_4 : f32 to vector<2x1024xf32>
    %12 = arith.mulf %0, %11 : vector<2x1024xf32>
    %cst_5 = arith.constant 2.000000e+01 : f32
    %13 = vector.broadcast %cst_5 : f32 to vector<2x1024xf32>
    %14 = arith.minimumf %12, %13 : vector<2x1024xf32>
    %15 = math.exp %14 : vector<2x1024xf32>
    %16 = math.log1p %15 : vector<2x1024xf32>
    %cst_6 = arith.constant 7.500000e-01 : f32
    %17 = vector.broadcast %cst_6 : f32 to vector<2x1024xf32>
    %18 = arith.mulf %16, %17 : vector<2x1024xf32>
    %cst_7 = arith.constant 1.500000e+01 : f32
    %19 = vector.broadcast %cst_7 : f32 to vector<2x1024xf32>
    %20 = arith.cmpf ole, %0, %19 : vector<2x1024xf32>
    %21 = arith.select %20, %18, %0 : vector<2x1024xi1>, vector<2x1024xf32>
    %cst_8 = arith.constant 5.000000e-01 : f32
    %22 = vector.broadcast %cst_8 : f32 to vector<2x1024xf32>
    %23 = arith.mulf %22, %21 : vector<2x1024xf32>
    %24 = arith.addf %10, %23 : vector<2x1024xf32>
    %c0_9 = arith.constant 0 : index
    %c0_10 = arith.constant 0 : index
    %25 = vector.load %arg2[%c0_9, %c0_10] : memref<2x1024xf32, #tpu.memory_space<vmem>>, vector<2x1024xf32>
    tpu.vector_store %arg2[%c0_9, %c0_10], %24 {strides = array<i32>} : memref<2x1024xf32, #tpu.memory_space<vmem>>, vector<2x1024xf32>,
    return
  }
  func.func @transform_0(%arg0: i32) -> (i32, i32) {
    %c0_i32 = arith.constant 0 : i32
    %c0_i32_0 = arith.constant 0 : i32
    return %arg0, %c0_i32 : i32, i32
  }
  func.func @transform_1(%arg0: i32) -> (i32, i32) {
    %c0_i32 = arith.constant 0 : i32
    %c0_i32_0 = arith.constant 0 : i32
    return %arg0, %c0_i32 : i32, i32
  }
}

</mosaic_0001>

<llo_original>
// kernel: tpu_custom_call.1
$region0: #{tpu_custom_call.1}
  #allocation0 [shape = 'u32[]', space=smem, size = 0x4, offset = 0x4, fixed_abs, tag = 'smem constant byte address 0x4 - core index']
  #allocation1 [shape = 'u32[144,128]{1,0:T(1,128)}', space=vmem, size = 0x12000, scoped, tag = 'internal scratch']
  %s0 = inlined_call_operand.hbm [shape: f32[2,1024], index: 0, kind: input, shape index: {}]
  %s1 = inlined_call_operand.hbm [shape: f32[2,1024], index: 1, kind: output, shape index: {}]
  %s2 = sld [smem:[#allocation0]]
  $region18: #{tpu_custom_call.1} parent=0
    _
  %s4 = ssub.s32 1, %s2
  %s5 = scalar_select 0, %s4, %s2
  $region1: #{tpu_custom_call.1} parent=0
    #allocation2 [shape = 'u8[8192]{0}', space=vmem, size = 0x2000, scoped, tag = 'input window, operand 0, single buffered']
    #allocation3 [shape = 's32[1]{0}', space=sflag, size = 0x4, scoped, tag = 'scoped memory for tpu_custom_call.1']
    #allocation4 [shape = 's32[1]{0}', space=sflag, size = 0x4, scoped, tag = 'scoped memory for tpu_custom_call.1']
    #allocation5 [shape = 'u8[8192]{0}', space=vmem, size = 0x2000, scoped, tag = 'output window, operand 0, single buffered']
    %6 = vsyncpa [#allocation3], 0
    %7 = vsyncpa [#allocation4], 0
    // Predicated region
    $region2: #{tpu_custom_call.1} parent=1 // pred_check
      _
    $region3: #{tpu_custom_call.1} parent=1 // pred_check_branch
      %9 = sbr.rel (0) target = $region5
    $region4: #{tpu_custom_call.1} parent=1 // pred_region
      %s11 = ssub.s32 256, 256
      %12 = vsyncadd [#allocation3], %s11
      %s14 = sshll.u32 [#allocation2], 4
      %s15 = int_to_ptr.vmem [resolvable:$true] %s14
      %17 = dma.hbm_to_vmem [thread:$0]  %s0, 256, %s15, [#allocation3]
    $region5: #{tpu_custom_call.1} parent=1 // pred_fallthru
      _
    // Predicated region
    $region6: #{tpu_custom_call.1} parent=1 // pred_check
      _
    $region7: #{tpu_custom_call.1} parent=1 // pred_check_branch
      %19 = sbr.rel (0) target = $region9
    $region8: #{tpu_custom_call.1} parent=1 // pred_region
      %20 = dma.done [#allocation3], 256
    $region9: #{tpu_custom_call.1} parent=1 // pred_fallthru
      _
    %v21 = vld [vmem:[#allocation2] sm:$0xff]
    %v22 = vld [vmem:[#allocation2 + $0x8] sm:$0xff]
    %v23 = vmul.f32 %v21, 0.16666667
    %v24 = vmul.f32 %v22, 0.16666667
    %v25 = vtanh.pop %v23
    %v26 = vtanh.pop %v24
    %v27 = vadd.f32 %v25, 1.0
    %v28 = vadd.f32 %v26, 1.0
    %v29 = vmul.f32 %v27, 0.5
    %v30 = vmul.f32 %v28, 0.5
    %v31 = vmul.f32 %v29, 0.5
    %v32 = vmul.f32 %v30, 0.5
    %v33 = vmul.f32 %v31, %v21
    %v34 = vmul.f32 %v32, %v22
    %v35 = vmul.f32 %v21, 1.3333334
    %v36 = vmul.f32 %v22, 1.3333334
    %v37 = vmin.f32 %v35, 20.0
    %v38 = vmin.f32 %v36, 20.0
    %v39 = vmul.f32 %v37, 1.442695
    %v40 = vpow.pop %v39
    %v41 = vmul.f32 %v38, 1.442695
    %v42 = vpow.pop %v41
    %v43 = vadd.f32 %v40, 1.0
    %v44 = vlog2.pop %v43
    %v45 = vmul.f32 %v44, 0.6931472
    %v46 = vmul.f32 -0.5, %v40
    %v47 = vadd.f32 %v46, 1.0
    %v48 = vmul.f32 %v47, %v40
    %v49 = vand.u32 2147483647, %v40
    %vm50 = vcmp.lt.f32.partialorder %v49, 0.0004427343
    %v51 = vsel %vm50, %v48, %v45
    %v52 = vadd.f32 %v42, 1.0
    %v53 = vlog2.pop %v52
    %v54 = vmul.f32 %v53, 0.6931472
    %v55 = vmul.f32 -0.5, %v42
    %v56 = vadd.f32 %v55, 1.0
    %v57 = vmul.f32 %v56, %v42
    %v58 = vand.u32 2147483647, %v42
    %vm59 = vcmp.lt.f32.partialorder %v58, 0.0004427343
    %v60 = vsel %vm59, %v57, %v54
    %v61 = vmul.f32 %v51, 0.75
    %v62 = vmul.f32 %v60, 0.75
    %vm63 = vcmp.le.f32.partialorder %v21, 15.0
    %vm64 = vcmp.le.f32.partialorder %v22, 15.0
    %v65 = vsel %vm63, %v61, %v21
    %v66 = vsel %vm64, %v62, %v22
    %v67 = vmul.f32 %v65, 0.5
    %v68 = vmul.f32 %v66, 0.5
    %v69 = vadd.f32 %v33, %v67
    %v70 = vadd.f32 %v34, %v68
    %71 = vst [vmem:[#allocation5] sm:$0xff] %v69
    %72 = vst [vmem:[#allocation5 + $0x8] sm:$0xff] %v70
    // Predicated region
    $region10: #{tpu_custom_call.1} parent=1 // pred_check
      _
    $region11: #{tpu_custom_call.1} parent=1 // pred_check_branch
      %74 = sbr.rel (0) target = $region13
    $region12: #{tpu_custom_call.1} parent=1 // pred_region
      %s76 = ssub.s32 256, 256
      %77 = vsyncadd [#allocation4], %s76
      %s79 = sshll.u32 [#allocation5], 4
      %s80 = int_to_ptr.vmem [resolvable:$true] %s79
      %82 = dma.vmem_to_hbm [thread:$0]  %s80, 256, %s1, [#allocation4]
    $region13: #{tpu_custom_call.1} parent=1 // pred_fallthru
      _
    // Predicated region
    $region14: #{tpu_custom_call.1} parent=1 // pred_check
      _
    $region15: #{tpu_custom_call.1} parent=1 // pred_check_branch
      %84 = sbr.rel (0) target = $region17
    $region16: #{tpu_custom_call.1} parent=1 // pred_region
      %85 = dma.done [#allocation4], 256
    $region17: #{tpu_custom_call.1} parent=1 // pred_fallthru
      _
    %86 = vsyncpa [#allocation3], 1
    %87 = vsyncpa [#allocation4], 1

</llo_original>
